<compile_context>
chip_gen: v6e
topology: v6e:2x2x1
jax: 0.10.0
libtpu: 0.0.40
codegen_flags: <defaults>
</compile_context>

<pallas_src>
import functools

import jax
import jax.numpy as jnp
from jax.experimental import pallas as pl
from jax.experimental.pallas import tpu as pltpu

LAMBDA_CLASS = 1.0
LAMBDA_NOOBJ = 10.0
LAMBDA_OBJ = 1.0
LAMBDA_BOX = 10.0


def _yolo_loss_kernel(anc_ref, pred_ref, targ_ref, out_ref, *, num_classes, tile):
    """Per-(lane-half, anchor, lane-tile) step.

    anc_ref : (3, 2)   f32 SMEM   anchor (w, h) table
    pred_ref: (5+C, T) VMEM       [conf, x, y, w, h, class logits...] raw logits
    targ_ref: (6, T)   VMEM       [conf, x, y, w, h, class]
    out_ref : (8, T)   f32 VMEM   per-lane partial sums, resident across the
                                  inner lane-tile axis; rows =
                                  [noobj_bce, noobj_cnt, obj_mse, obj_cnt,
                                   box_sq, class_ce, 0, 0]
    """
    j = pl.program_id(2)          # inner lane-tile index (reduction axis)
    a_idx = pl.program_id(1)      # anchor index (0..2) -> scalar SMEM lookup

    aw = anc_ref[a_idx, 0]
    ah = anc_ref[a_idx, 1]
    inv_aw = 1.0 / aw             # scalar reciprocals hoisted off the vector EUP
    inv_ah = 1.0 / ah

    pred = pred_ref[...].astype(jnp.float32)         # (5+C, T)
    targ = targ_ref[...].astype(jnp.float32)         # (6, T)

    conf = pred[0:1, :]                              # (1, T) raw conf logit
    tconf = targ[0:1, :]
    obj = (tconf == 1.0).astype(jnp.float32)         # padded lanes have tconf=-1
    noobj = (tconf == 0.0).astype(jnp.float32)       #   -> both masks are 0 there

    # --- no-object loss: BCE-with-logits(conf, tconf) --------------------------
    e = jnp.exp(-jnp.abs(conf))
    bce = jnp.maximum(conf, 0.0) - conf * tconf + jnp.log1p(e)
    # sigmoid(conf) reusing e (saves a second exp on the single EUP slot)
    sconf = jnp.where(conf >= 0.0, 1.0, e) / (1.0 + e)

    # --- decoded boxes & IoU (midpoint format) ---------------------------------
    sx = jax.nn.sigmoid(pred[1:2, :])
    sy = jax.nn.sigmoid(pred[2:3, :])
    pw = jnp.exp(pred[3:4, :]) * aw
    ph = jnp.exp(pred[4:5, :]) * ah
    tx, ty = targ[1:2, :], targ[2:3, :]
    tw, th = targ[3:4, :], targ[4:5, :]

    p_x1, p_y1 = sx - 0.5 * pw, sy - 0.5 * ph
    p_x2, p_y2 = sx + 0.5 * pw, sy + 0.5 * ph
    t_x1, t_y1 = tx - 0.5 * tw, ty - 0.5 * th
    t_x2, t_y2 = tx + 0.5 * tw, ty + 0.5 * th
    inter_w = jnp.maximum(jnp.minimum(p_x2, t_x2) - jnp.maximum(p_x1, t_x1), 0.0)
    inter_h = jnp.maximum(jnp.minimum(p_y2, t_y2) - jnp.maximum(p_y1, t_y1), 0.0)
    inter = inter_w * inter_h
    # widths / heights are non-negative by construction -> no abs() needed
    union = pw * ph + tw * th - inter + 1e-6
    iou = inter * pl.reciprocal(union, approx=True)

    # --- object loss: MSE(sigmoid(conf), iou * tconf), obj cells only ----------
    obj_se = (sconf - iou * tconf) ** 2

    # --- box loss: MSE([sig x, sig y, w, h], [tx, ty, log(eps + t_wh/anchor)]) -
    twl = jnp.log(1e-16 + tw * inv_aw)
    thl = jnp.log(1e-16 + th * inv_ah)
    box_se = ((sx - tx) ** 2 + (sy - ty) ** 2
              + (pred[3:4, :] - twl) ** 2 + (pred[4:5, :] - thl) ** 2)

    # --- class loss: cross-entropy over class logits, obj cells only -----------
    cls_logits = pred[5:, :]                                         # (C, T)
    mmax = jnp.max(cls_logits, axis=0, keepdims=True)
    lse = mmax + jnp.log(jnp.sum(jnp.exp(cls_logits - mmax), axis=0, keepdims=True))
    cls_idx = targ[5:6, :].astype(jnp.int32)                         # (1, T)
    row_ids = jax.lax.broadcasted_iota(jnp.int32, (num_classes, tile), 0)
    picked = jnp.sum(jnp.where(row_ids == cls_idx, cls_logits, 0.0),
                     axis=0, keepdims=True)
    ce = lse - picked                                                # (1, T)

    # --- single packed full-width store / accumulate ---------------------------
    packed = jnp.concatenate(
        [bce * noobj, noobj, obj_se * obj, obj, box_se * obj, ce * obj,
         jnp.zeros((2, tile), jnp.float32)], axis=0)                 # (8, T)

    @pl.when(j == 0)
    def _first():
        out_ref[...] = packed

    @pl.when(j != 0)
    def _accum():
        out_ref[...] += packed


def yolo_loss(predictions, target, anchors, *, max_tile=16384):
    """predictions: (B, 3, S, S, 5 + C)
       target     : (B, 3, S, S, 6)     [conf, x, y, w, h, class]
       anchors    : (3, 2)
    """
    assert max_tile % 128 == 0
    b, a, s, s2, p = predictions.shape
    assert s == s2 and anchors.shape == (a, 2) and target.shape[-1] == 6
    c = p - 5
    assert c >= 1
    n = b * s * s

    anchors = anchors.astype(jnp.float32)

    # Single fused channel-major relayout per array (predictions read once; box
    # and class logits stay merged).  Inputs keep their dtype (bf16 stays bf16).
    # TODO(synk): in a real pipeline the detection head should emit channel-major
    # activations so even this one transpose fuses into the producing op.
    pred_cm = jnp.transpose(predictions, (1, 4, 0, 2, 3)).reshape(a, p, n)
    targ_cm = jnp.transpose(target, (1, 4, 0, 2, 3)).reshape(a, 6, n)

    # Lane tiling: collapse to at most a handful of large steps.  n_outer gives a
    # second parallel axis (v7x has 2 TensorCores); the inner axis accumulates.
    if n <= max_tile:
        if n >= 256 and n % 256 == 0:
            tile, n_outer, n_inner = n // 2, 2, 1
        else:
            tile, n_outer, n_inner = n, 1, 1          # full-slab block (no 128 req.)
    else:
        tile = max_tile
        n_outer = 2
        n_inner = pl.cdiv(pl.cdiv(n, tile), n_outer)
    n_pad = n_outer * n_inner * tile

    pad = n_pad - n
    if pad:
        # Sentinel conf = -1 makes padded cells neither obj nor noobj, so they
        # contribute exactly zero -> no per-tile masking inside the kernel.
        pred_cm = jnp.pad(pred_cm, ((0, 0), (0, 0), (0, pad)))
        pad_t = jnp.concatenate(
            [jnp.full((a, 1, pad), -1.0, targ_cm.dtype),
             jnp.zeros((a, 5, pad), targ_cm.dtype)], axis=1)
        targ_cm = jnp.concatenate([targ_cm, pad_t], axis=-1)

    kernel = functools.partial(_yolo_loss_kernel, num_classes=c, tile=tile)
    lane_idx = lambda o, ai, j: (ai, 0, o * n_inner + j)

    bytes_accessed = int(pred_cm.size * pred_cm.dtype.itemsize
                         + targ_cm.size * targ_cm.dtype.itemsize
                         + n_outer * a * 8 * tile * 4
                         + anchors.size * 4)

    sums = pl.pallas_call(
        kernel,
        grid=(n_outer, a, n_inner),
        in_specs=[
            pl.BlockSpec(memory_space=pltpu.MemorySpace.SMEM),   # anchors (3, 2)
            pl.BlockSpec((None, p, tile), lane_idx),             # merged pred logits
            pl.BlockSpec((None, 6, tile), lane_idx),             # targets
        ],
        out_specs=pl.BlockSpec((None, None, 8, tile),
                               lambda o, ai, j: (o, ai, 0, 0)),
        out_shape=jax.ShapeDtypeStruct((n_outer, a, 8, tile), jnp.float32),
        compiler_params=pltpu.CompilerParams(
            dimension_semantics=("parallel", "parallel", "arbitrary")),
        cost_estimate=pl.CostEstimate(
            flops=int(a * n_pad * (64 + 8 * c)),
            transcendentals=int(a * n_pad * (11 + c)),
            bytes_accessed=bytes_accessed),
    )(anchors, pred_cm, targ_cm)

    # Tiny cross-lane reduction on the (n_outer, 3, 8, tile) partials in XLA.
    r = jnp.sum(sums, axis=(0, 1, 3))                 # (8,)
    noobj_bce_sum = r[0]
    noobj_cnt = jnp.maximum(r[1], 1.0)
    obj_mse_sum = r[2]
    obj_cnt = jnp.maximum(r[3], 1.0)
    box_sum = r[4]
    class_sum = r[5]

    no_object_loss = noobj_bce_sum / noobj_cnt        # mean over noobj conf elems
    object_loss = obj_mse_sum / obj_cnt               # mean over obj conf elems
    box_loss = box_sum / (4.0 * obj_cnt)              # mean over 4 box channels
    class_loss = class_sum / obj_cnt                  # mean over obj cells

    return (LAMBDA_BOX * box_loss + LAMBDA_OBJ * object_loss
            + LAMBDA_NOOBJ * no_object_loss + LAMBDA_CLASS * class_loss)
    # TODO(synk): the build_targets / metrics block in the PyTorch forward is
    # unreachable & references undefined symbols (x, y, pred_conf, output, ...);
    # it is intentionally not reproduced.


def _yolo_loss_reference(predictions, target, anchors):
    """Pure-JAX reference mirroring the reachable PyTorch semantics."""
    predictions = predictions.astype(jnp.float32)
    target = target.astype(jnp.float32)
    anc = anchors.astype(jnp.float32).reshape(1, 3, 1, 1, 2)
    obj = target[..., 0] == 1.0
    noobj = target[..., 0] == 0.0
    obj_f = obj.astype(jnp.float32)
    noobj_f = noobj.astype(jnp.float32)

    conf = predictions[..., 0]
    bce = (jnp.maximum(conf, 0.0) - conf * target[..., 0]
           + jnp.log1p(jnp.exp(-jnp.abs(conf))))
    no_object_loss = jnp.sum(bce * noobj_f) / jnp.maximum(jnp.sum(noobj_f), 1.0)

    sxy = jax.nn.sigmoid(predictions[..., 1:3])
    pwh = jnp.exp(predictions[..., 3:5]) * anc
    p1 = sxy - pwh / 2.0
    p2 = sxy + pwh / 2.0
    t1 = target[..., 1:3] - target[..., 3:5] / 2.0
    t2 = target[..., 1:3] + target[..., 3:5] / 2.0
    iw = jnp.maximum(jnp.minimum(p2[..., 0], t2[..., 0])
                     - jnp.maximum(p1[..., 0], t1[..., 0]), 0.0)
    ih = jnp.maximum(jnp.minimum(p2[..., 1], t2[..., 1])
                     - jnp.maximum(p1[..., 1], t1[..., 1]), 0.0)
    inter = iw * ih
    union = pwh[..., 0] * pwh[..., 1] + target[..., 3] * target[..., 4] - inter + 1e-6
    ious = inter / union

    sconf = jax.nn.sigmoid(conf)
    object_loss = (jnp.sum(((sconf - ious * target[..., 0]) ** 2) * obj_f)
                   / jnp.maximum(jnp.sum(obj_f), 1.0))

    pb = jnp.concatenate([sxy, predictions[..., 3:5]], axis=-1)
    tb = jnp.concatenate([target[..., 1:3],
                          jnp.log(1e-16 + target[..., 3:5] / anc)], axis=-1)
    box_loss = (jnp.sum(((pb - tb) ** 2) * obj_f[..., None])
                / jnp.maximum(4.0 * jnp.sum(obj_f), 1.0))

    logits = predictions[..., 5:]
    lse = jax.scipy.special.logsumexp(logits, axis=-1)
    cls = target[..., 5].astype(jnp.int32)
    picked = jnp.take_along_axis(logits, cls[..., None], axis=-1)[..., 0]
    class_loss = jnp.sum((lse - picked) * obj_f) / jnp.maximum(jnp.sum(obj_f), 1.0)

    return (LAMBDA_BOX * box_loss + LAMBDA_OBJ * object_loss
            + LAMBDA_NOOBJ * no_object_loss + LAMBDA_CLASS * class_loss)


if __name__ == "__main__":
    key = jax.random.PRNGKey(0)
    B, A, S, C = 2, 3, 8, 4
    P = 5 + C

    k1, k2, k3, k4, k5 = jax.random.split(key, 5)
    predictions = jax.random.normal(k1, (B, A, S, S, P), jnp.float32)

    # deterministic synthetic targets: ~20% obj cells with valid boxes/classes
    obj_mask = (jax.random.uniform(k2, (B, A, S, S)) < 0.2).astype(jnp.float32)
    xy = jax.random.uniform(k3, (B, A, S, S, 2), minval=0.05, maxval=0.95)
    wh = jax.random.uniform(k4, (B, A, S, S, 2), minval=0.1, maxval=2.0)
    cls = jax.random.randint(k5, (B, A, S, S, 1), 0, C).astype(jnp.float32)
    target = jnp.concatenate(
        [obj_mask[..., None],
         xy * obj_mask[..., None],
         wh * obj_mask[..., None],
         cls * obj_mask[..., None]],
        axis=-1,
    )

    anchors = jnp.array([[0.28, 0.22], [0.38, 0.48], [0.90, 0.78]], jnp.float32)

    loss = jax.jit(yolo_loss)(predictions, target, anchors)
    jax.block_until_ready(loss)
    assert loss.shape == () and jnp.isfinite(loss)

    ref = _yolo_loss_reference(predictions, target, anchors)
    assert abs(float(loss) - float(ref)) <= 2e-3 * (1.0 + abs(float(ref))), (loss, ref)

    print("KERNEL_OK")
</pallas_src>

<mosaic_0001>
module attributes {stable_mosaic.version = 11 : i64} {
  func.func @_yolo_loss_kernel(%arg0: i32, %arg1: i32, %arg2: i32, %arg3: memref<3x2xf32, #tpu.memory_space<smem>>, %arg4: memref<1x9x128xf32, #tpu.memory_space<vmem>>, %arg5: memref<1x6x128xf32, #tpu.memory_space<vmem>>, %arg6: memref<1x1x8x128xf32, #tpu.memory_space<vmem>>) attributes {dimension_semantics = [#tpu.dimension_semantics<parallel>, #tpu.dimension_semantics<parallel>, #tpu.dimension_semantics<arbitrary>], iteration_bounds = array<i64: 1, 3, 1>, scalar_prefetch = 0 : i64, scratch_operands = 0 : i64, tpu.core_type = #tpu.core_type<tc>, window_params = [{transform_indices = @transform_0, window_bounds = array<i64: 3, 2>}, {transform_indices = @transform_1, window_bounds = array<i64: 1, 9, 128>}, {transform_indices = @transform_2, window_bounds = array<i64: 1, 6, 128>}, {transform_indices = @transform_3, window_bounds = array<i64: 1, 1, 8, 128>}]} {
    %0 = arith.index_cast %arg1 : i32 to index
    %c0 = arith.constant 0 : index
    %1 = memref.load %arg3[%0, %c0] : memref<3x2xf32, #tpu.memory_space<smem>>
    %2 = arith.index_cast %arg1 : i32 to index
    %c1 = arith.constant 1 : index
    %3 = memref.load %arg3[%2, %c1] : memref<3x2xf32, #tpu.memory_space<smem>>
    %cst = arith.constant 1.000000e+00 : f32
    %4 = arith.divf %cst, %1 : f32
    %cst_0 = arith.constant 1.000000e+00 : f32
    %5 = arith.divf %cst_0, %3 : f32
    %c0_1 = arith.constant 0 : index
    %c0_2 = arith.constant 0 : index
    %c0_3 = arith.constant 0 : index
    %6 = vector.load %arg4[%c0_1, %c0_2, %c0_3] : memref<1x9x128xf32, #tpu.memory_space<vmem>>, vector<1x9x128xf32>
    %7 = vector.shape_cast %6 : vector<1x9x128xf32> to vector<9x128xf32>
    %c0_4 = arith.constant 0 : index
    %c0_5 = arith.constant 0 : index
    %c0_6 = arith.constant 0 : index
    %8 = vector.load %arg5[%c0_4, %c0_5, %c0_6] : memref<1x6x128xf32, #tpu.memory_space<vmem>>, vector<1x6x128xf32>
    %9 = vector.shape_cast %8 : vector<1x6x128xf32> to vector<6x128xf32>
    %10 = vector.extract_strided_slice %7 {offsets = [0, 0], sizes = [1, 128], strides = [1, 1]} : vector<9x128xf32> to vector<1x128xf32>
    %11 = vector.extract_strided_slice %9 {offsets = [0, 0], sizes = [1, 128], strides = [1, 1]} : vector<6x128xf32> to vector<1x128xf32>
    %cst_7 = arith.constant 1.000000e+00 : f32
    %12 = vector.broadcast %cst_7 : f32 to vector<1x128xf32>
    %13 = arith.cmpf oeq, %11, %12 : vector<1x128xf32>
    %14 = arith.extui %13 : vector<1x128xi1> to vector<1x128xi32>
    %15 = arith.sitofp %14 : vector<1x128xi32> to vector<1x128xf32>
    %cst_8 = arith.constant 0.000000e+00 : f32
    %16 = vector.broadcast %cst_8 : f32 to vector<1x128xf32>
    %17 = arith.cmpf oeq, %11, %16 : vector<1x128xf32>
    %18 = arith.extui %17 : vector<1x128xi1> to vector<1x128xi32>
    %19 = arith.sitofp %18 : vector<1x128xi32> to vector<1x128xf32>
    %20 = math.absf %10 : vector<1x128xf32>
    %cst_9 = arith.constant 0.000000e+00 : f32
    %21 = vector.broadcast %cst_9 : f32 to vector<1x128xf32>
    %22 = arith.subf %21, %20 : vector<1x128xf32>
    %23 = math.exp %22 : vector<1x128xf32>
    %cst_10 = arith.constant 0.000000e+00 : f32
    %24 = vector.broadcast %cst_10 : f32 to vector<1x128xf32>
    %25 = arith.maximumf %10, %24 : vector<1x128xf32>
    %26 = arith.mulf %10, %11 : vector<1x128xf32>
    %27 = arith.subf %25, %26 : vector<1x128xf32>
    %28 = math.log1p %23 : vector<1x128xf32>
    %29 = arith.addf %27, %28 : vector<1x128xf32>
    %cst_11 = arith.constant 0.000000e+00 : f32
    %30 = vector.broadcast %cst_11 : f32 to vector<1x128xf32>
    %31 = arith.cmpf oge, %10, %30 : vector<1x128xf32>
    %cst_12 = arith.constant 1.000000e+00 : f32
    %32 = vector.broadcast %cst_12 : f32 to vector<1x128xf32>
    %33 = arith.select %31, %32, %23 : vector<1x128xi1>, vector<1x128xf32>
    %cst_13 = arith.constant 1.000000e+00 : f32
    %34 = vector.broadcast %cst_13 : f32 to vector<1x128xf32>
    %35 = arith.addf %34, %23 : vector<1x128xf32>
    %36 = arith.divf %33, %35 : vector<1x128xf32>
    %37 = vector.extract_strided_slice %7 {offsets = [1, 0], sizes = [1, 128], strides = [1, 1]} : vector<9x128xf32> to vector<1x128xf32>
    %38 = arith.negf %37 : vector<1x128xf32>
    %39 = math.exp %38 : vector<1x128xf32>
    %cst_14 = arith.constant 1.000000e+00 : f32
    %40 = vector.broadcast %cst_14 : f32 to vector<1x128xf32>
    %41 = arith.addf %40, %39 : vector<1x128xf32>
    %42 = arith.divf %40, %41 : vector<1x128xf32>
    %43 = vector.extract_strided_slice %7 {offsets = [2, 0], sizes = [1, 128], strides = [1, 1]} : vector<9x128xf32> to vector<1x128xf32>
    %44 = arith.negf %43 : vector<1x128xf32>
    %45 = math.exp %44 : vector<1x128xf32>
    %cst_15 = arith.constant 1.000000e+00 : f32
    %46 = vector.broadcast %cst_15 : f32 to vector<1x128xf32>
    %47 = arith.addf %46, %45 : vector<1x128xf32>
    %48 = arith.divf %46, %47 : vector<1x128xf32>
    %49 = vector.extract_strided_slice %7 {offsets = [3, 0], sizes = [1, 128], strides = [1, 1]} : vector<9x128xf32> to vector<1x128xf32>
    %50 = math.exp %49 : vector<1x128xf32>
    %51 = vector.broadcast %1 : f32 to vector<1x128xf32>
    %52 = arith.mulf %50, %51 : vector<1x128xf32>
    %53 = vector.extract_strided_slice %7 {offsets = [4, 0], sizes = [1, 128], strides = [1, 1]} : vector<9x128xf32> to vector<1x128xf32>
    %54 = math.exp %53 : vector<1x128xf32>
    %55 = vector.broadcast %3 : f32 to vector<1x128xf32>
    %56 = arith.mulf %54, %55 : vector<1x128xf32>
    %57 = vector.extract_strided_slice %9 {offsets = [1, 0], sizes = [1, 128], strides = [1, 1]} : vector<6x128xf32> to vector<1x128xf32>
    %58 = vector.extract_strided_slice %9 {offsets = [2, 0], sizes = [1, 128], strides = [1, 1]} : vector<6x128xf32> to vector<1x128xf32>
    %59 = vector.extract_strided_slice %9 {offsets = [3, 0], sizes = [1, 128], strides = [1, 1]} : vector<6x128xf32> to vector<1x128xf32>
    %60 = vector.extract_strided_slice %9 {offsets = [4, 0], sizes = [1, 128], strides = [1, 1]} : vector<6x128xf32> to vector<1x128xf32>
    %cst_16 = arith.constant 5.000000e-01 : f32
    %61 = vector.broadcast %cst_16 : f32 to vector<1x128xf32>
    %62 = arith.mulf %61, %52 : vector<1x128xf32>
    %63 = arith.subf %42, %62 : vector<1x128xf32>
    %cst_17 = arith.constant 5.000000e-01 : f32
    %64 = vector.broadcast %cst_17 : f32 to vector<1x128xf32>
    %65 = arith.mulf %64, %56 : vector<1x128xf32>
    %66 = arith.subf %48, %65 : vector<1x128xf32>
    %cst_18 = arith.constant 5.000000e-01 : f32
    %67 = vector.broadcast %cst_18 : f32 to vector<1x128xf32>
    %68 = arith.mulf %67, %52 : vector<1x128xf32>
    %69 = arith.addf %42, %68 : vector<1x128xf32>
    %cst_19 = arith.constant 5.000000e-01 : f32
    %70 = vector.broadcast %cst_19 : f32 to vector<1x128xf32>
    %71 = arith.mulf %70, %56 : vector<1x128xf32>
    %72 = arith.addf %48, %71 : vector<1x128xf32>
    %cst_20 = arith.constant 5.000000e-01 : f32
    %73 = vector.broadcast %cst_20 : f32 to vector<1x128xf32>
    %74 = arith.mulf %73, %59 : vector<1x128xf32>
    %75 = arith.subf %57, %74 : vector<1x128xf32>
    %cst_21 = arith.constant 5.000000e-01 : f32
    %76 = vector.broadcast %cst_21 : f32 to vector<1x128xf32>
    %77 = arith.mulf %76, %60 : vector<1x128xf32>
    %78 = arith.subf %58, %77 : vector<1x128xf32>
    %cst_22 = arith.constant 5.000000e-01 : f32
    %79 = vector.broadcast %cst_22 : f32 to vector<1x128xf32>
    %80 = arith.mulf %79, %59 : vector<1x128xf32>
    %81 = arith.addf %57, %80 : vector<1x128xf32>
    %cst_23 = arith.constant 5.000000e-01 : f32
    %82 = vector.broadcast %cst_23 : f32 to vector<1x128xf32>
    %83 = arith.mulf %82, %60 : vector<1x128xf32>
    %84 = arith.addf %58, %83 : vector<1x128xf32>
    %85 = arith.minimumf %69, %81 : vector<1x128xf32>
    %86 = arith.maximumf %63, %75 : vector<1x128xf32>
    %87 = arith.subf %85, %86 : vector<1x128xf32>
    %cst_24 = arith.constant 0.000000e+00 : f32
    %88 = vector.broadcast %cst_24 : f32 to vector<1x128xf32>
    %89 = arith.maximumf %87, %88 : vector<1x128xf32>
    %90 = arith.minimumf %72, %84 : vector<1x128xf32>
    %91 = arith.maximumf %66, %78 : vector<1x128xf32>
    %92 = arith.subf %90, %91 : vector<1x128xf32>
    %cst_25 = arith.constant 0.000000e+00 : f32
    %93 = vector.broadcast %cst_25 : f32 to vector<1x128xf32>
    %94 = arith.maximumf %92, %93 : vector<1x128xf32>
    %95 = arith.mulf %89, %94 : vector<1x128xf32>
    %96 = arith.mulf %52, %56 : vector<1x128xf32>
    %97 = arith.mulf %59, %60 : vector<1x128xf32>
    %98 = arith.addf %96, %97 : vector<1x128xf32>
    %99 = arith.subf %98, %95 : vector<1x128xf32>
    %cst_26 = arith.constant 9.99999997E-7 : f32
    %100 = vector.broadcast %cst_26 : f32 to vector<1x128xf32>
    %101 = arith.addf %99, %100 : vector<1x128xf32>
    %102 = tpu.reciprocal %101 {approx = true} : vector<1x128xf32> -> vector<1x128xf32>
    %103 = arith.mulf %95, %102 : vector<1x128xf32>
    %104 = arith.mulf %103, %11 : vector<1x128xf32>
    %105 = arith.subf %36, %104 : vector<1x128xf32>
    %106 = arith.mulf %105, %105 : vector<1x128xf32>
    %107 = vector.broadcast %4 : f32 to vector<1x128xf32>
    %108 = arith.mulf %59, %107 : vector<1x128xf32>
    %cst_27 = arith.constant 1.000000e-16 : f32
    %109 = vector.broadcast %cst_27 : f32 to vector<1x128xf32>
    %110 = arith.addf %109, %108 : vector<1x128xf32>
    %111 = math.log %110 : vector<1x128xf32>
    %112 = vector.broadcast %5 : f32 to vector<1x128xf32>
    %113 = arith.mulf %60, %112 : vector<1x128xf32>
    %cst_28 = arith.constant 1.000000e-16 : f32
    %114 = vector.broadcast %cst_28 : f32 to vector<1x128xf32>
    %115 = arith.addf %114, %113 : vector<1x128xf32>
    %116 = math.log %115 : vector<1x128xf32>
    %117 = arith.subf %42, %57 : vector<1x128xf32>
    %118 = arith.mulf %117, %117 : vector<1x128xf32>
    %119 = arith.subf %48, %58 : vector<1x128xf32>
    %120 = arith.mulf %119, %119 : vector<1x128xf32>
    %121 = arith.addf %118, %120 : vector<1x128xf32>
    %122 = vector.extract_strided_slice %7 {offsets = [3, 0], sizes = [1, 128], strides = [1, 1]} : vector<9x128xf32> to vector<1x128xf32>
    %123 = arith.subf %122, %111 : vector<1x128xf32>
    %124 = arith.mulf %123, %123 : vector<1x128xf32>
    %125 = arith.addf %121, %124 : vector<1x128xf32>
    %126 = vector.extract_strided_slice %7 {offsets = [4, 0], sizes = [1, 128], strides = [1, 1]} : vector<9x128xf32> to vector<1x128xf32>
    %127 = arith.subf %126, %116 : vector<1x128xf32>
    %128 = arith.mulf %127, %127 : vector<1x128xf32>
    %129 = arith.addf %125, %128 : vector<1x128xf32>
    %130 = vector.extract_strided_slice %7 {offsets = [5, 0], sizes = [4, 128], strides = [1, 1]} : vector<9x128xf32> to vector<4x128xf32>
    %cst_29 = arith.constant dense<0xFF800000> : vector<128xf32>
    %131 = vector.multi_reduction <maximumf>, %130, %cst_29 [0] : vector<4x128xf32> to vector<128xf32>
    %132 = vector.shape_cast %131 : vector<128xf32> to vector<1x128xf32>
    %133 = vector.broadcast %132 : vector<1x128xf32> to vector<4x128xf32>
    %134 = arith.subf %130, %133 : vector<4x128xf32>
    %135 = math.exp %134 : vector<4x128xf32>
    %cst_30 = arith.constant dense<0.000000e+00> : vector<128xf32>
    %136 = vector.multi_reduction <add>, %135, %cst_30 [0] : vector<4x128xf32> to vector<128xf32>
    %137 = vector.shape_cast %136 : vector<128xf32> to vector<1x128xf32>
    %138 = math.log %137 : vector<1x128xf32>
    %139 = arith.addf %132, %138 : vector<1x128xf32>
    %140 = vector.extract_strided_slice %9 {offsets = [5, 0], sizes = [1, 128], strides = [1, 1]} : vector<6x128xf32> to vector<1x128xf32>
    %141 = arith.fptosi %140 : vector<1x128xf32> to vector<1x128xi32>
    %142 = tpu.iota {dimensions = array<i32: 0>} : vector<4x128xi32>
    %143 = vector.broadcast %141 : vector<1x128xi32> to vector<4x128xi32>
    %144 = arith.cmpi eq, %142, %143 : vector<4x128xi32>
    %cst_31 = arith.constant 0.000000e+00 : f32
    %145 = vector.broadcast %cst_31 : f32 to vector<4x128xf32>
    %146 = arith.select %144, %130, %145 : vector<4x128xi1>, vector<4x128xf32>
    %cst_32 = arith.constant dense<0.000000e+00> : vector<128xf32>
    %147 = vector.multi_reduction <add>, %146, %cst_32 [0] : vector<4x128xf32> to vector<128xf32>
    %148 = vector.shape_cast %147 : vector<128xf32> to vector<1x128xf32>
    %149 = arith.subf %139, %148 : vector<1x128xf32>
    %150 = arith.mulf %29, %19 : vector<1x128xf32>
    %151 = arith.mulf %106, %15 : vector<1x128xf32>
    %152 = arith.mulf %129, %15 : vector<1x128xf32>
    %153 = arith.mulf %149, %15 : vector<1x128xf32>
    %cst_33 = arith.constant 0.000000e+00 : f32
    %154 = vector.broadcast %cst_33 : f32 to vector<2x128xf32>
    %155 = tpu.concatenate %150, %19, %151, %15, %152, %153, %154 in 0 : vector<1x128xf32>, vector<1x128xf32>, vector<1x128xf32>, vector<1x128xf32>, vector<1x128xf32>, vector<1x128xf32>, vector<2x128xf32> -> vector<8x128xf32>
    %c0_i32 = arith.constant 0 : i32
    %156 = arith.cmpi eq, %arg2, %c0_i32 : i32
    %157 = arith.extui %156 : i1 to i32
    %c0_i32_34 = arith.constant 0 : i32
    %158 = arith.cmpi ne, %157, %c0_i32_34 : i32
    scf.if %158 {
      %c0_37 = arith.constant 0 : index
      %c0_38 = arith.constant 0 : index
      %c0_39 = arith.constant 0 : index
      %c0_40 = arith.constant 0 : index
      %162 = vector.load %arg6[%c0_37, %c0_38, %c0_39, %c0_40] : memref<1x1x8x128xf32, #tpu.memory_space<vmem>>, vector<1x1x8x128xf32>
      %163 = vector.shape_cast %162 : vector<1x1x8x128xf32> to vector<8x128xf32>
      %164 = vector.shape_cast %155 : vector<8x128xf32> to vector<1x1x8x128xf32>
      tpu.vector_store %arg6[%c0_37, %c0_38, %c0_39, %c0_40], %164 {strides = array<i32>} : memref<1x1x8x128xf32, #tpu.memory_space<vmem>>, vector<1x1x8x128xf32>,
    } else {
    }
    %c0_i32_35 = arith.constant 0 : i32
    %159 = arith.cmpi ne, %arg2, %c0_i32_35 : i32
    %160 = arith.extui %159 : i1 to i32
    %c0_i32_36 = arith.constant 0 : i32
    %161 = arith.cmpi ne, %160, %c0_i32_36 : i32
    scf.if %161 {
      %c0_37 = arith.constant 0 : index
      %c0_38 = arith.constant 0 : index
      %c0_39 = arith.constant 0 : index
      %c0_40 = arith.constant 0 : index
      %162 = vector.load %arg6[%c0_37, %c0_38, %c0_39, %c0_40] : memref<1x1x8x128xf32, #tpu.memory_space<vmem>>, vector<1x1x8x128xf32>
      %163 = vector.shape_cast %162 : vector<1x1x8x128xf32> to vector<8x128xf32>
      %164 = arith.addf %163, %155 : vector<8x128xf32>
      %c0_41 = arith.constant 0 : index
      %c0_42 = arith.constant 0 : index
      %c0_43 = arith.constant 0 : index
      %c0_44 = arith.constant 0 : index
      %165 = vector.load %arg6[%c0_41, %c0_42, %c0_43, %c0_44] : memref<1x1x8x128xf32, #tpu.memory_space<vmem>>, vector<1x1x8x128xf32>
      %166 = vector.shape_cast %165 : vector<1x1x8x128xf32> to vector<8x128xf32>
      %167 = vector.shape_cast %164 : vector<8x128xf32> to vector<1x1x8x128xf32>
      tpu.vector_store %arg6[%c0_41, %c0_42, %c0_43, %c0_44], %167 {strides = array<i32>} : memref<1x1x8x128xf32, #tpu.memory_space<vmem>>, vector<1x1x8x128xf32>,
    } else {
    }
    return
  }
  func.func @transform_0(%arg0: i32, %arg1: i32, %arg2: i32) -> (i32, i32) {
    %c0_i32 = arith.constant 0 : i32
    %c0_i32_0 = arith.constant 0 : i32
    %c0_i32_1 = arith.constant 0 : i32
    return %c0_i32, %c0_i32_0 : i32, i32
  }
  func.func @transform_1(%arg0: i32, %arg1: i32, %arg2: i32) -> (i32, i32, i32) {
    %c1_i32 = arith.constant 1 : i32
    %0 = arith.muli %arg0, %c1_i32 : i32
    %1 = arith.addi %0, %arg2 : i32
    %c0_i32 = arith.constant 0 : i32
    %c0_i32_0 = arith.constant 0 : i32
    return %arg1, %c0_i32, %1 : i32, i32, i32
  }
  func.func @transform_2(%arg0: i32, %arg1: i32, %arg2: i32) -> (i32, i32, i32) {
    %c1_i32 = arith.constant 1 : i32
    %0 = arith.muli %arg0, %c1_i32 : i32
    %1 = arith.addi %0, %arg2 : i32
    %c0_i32 = arith.constant 0 : i32
    %c0_i32_0 = arith.constant 0 : i32
    return %arg1, %c0_i32, %1 : i32, i32, i32
  }
  func.func @transform_3(%arg0: i32, %arg1: i32, %arg2: i32) -> (i32, i32, i32, i32) {
    %c0_i32 = arith.constant 0 : i32
    %c0_i32_0 = arith.constant 0 : i32
    %c0_i32_1 = arith.constant 0 : i32
    return %arg0, %arg1, %c0_i32, %c0_i32_0 : i32, i32, i32, i32
  }
}

</mosaic_0001>

<llo_original>
// kernel: yolo_loss.1
$region0: #{yolo_loss.1}
  #allocation0 [shape = 'u32[]', space=smem, size = 0x4, offset = 0x4, fixed_abs, tag = 'smem constant byte address 0x4 - core index']
  #allocation1 [shape = 'u32[144,128]{1,0:T(1,128)}', space=vmem, size = 0x12000, scoped, tag = 'internal scratch']
  %s0 = inlined_call_operand.vmem [shape: f32[3,2], index: 0, kind: input, shape index: {}]
  %s1 = inlined_call_operand.vmem [shape: f32[3,9,128], index: 1, kind: input, shape index: {}]
  %s2 = inlined_call_operand.vmem [shape: f32[3,6,128], index: 2, kind: input, shape index: {}]
  %s3 = inlined_call_operand.vmem [shape: f32[1,3,8,128], index: 3, kind: output, shape index: {}]
  %s4 = sld [smem:[#allocation0]]
  $region57: #{yolo_loss.1} parent=0
    _
  %s6 = ssub.s32 1, %s4
  %s7 = scalar_select 0, %s6, %s4
  $region1: #{yolo_loss.1} parent=0
    #allocation2 [shape = 'u8[2048]{0}', space=smem, size = 0x800, scoped, tag = 'input window, operand 0, single buffered']
    #allocation3 [shape = 's32[2]{0}', space=sflag, size = 0x8, scoped, tag = 'scoped memory for yolo_loss.1']
    %8 = vsyncpa [#allocation3], 0
    loop: start=0, step=1, limit=5
    $region2: #{yolo_loss.1} parent=1 // loop_pre_header
      _
    $region3: #{yolo_loss.1} parent=1 // loop_header
      %s10 = sphi 0, %s14
      %p11 = scmp.ge.s32.totalorder %s10, 5
      %s17 = sphi 0, %s36
      %s18 = sphi 0, %s32
      %s19 = sphi 0, %s28
      %s20 = sphi 0, %s17
      %s21 = sphi 0, %s18
      %s22 = sphi 0, %s19
      %s23 = sphi 0, %s20
      %s24 = sphi 0, %s21
      %s25 = sphi 0, %s22
      %s37 = sphi 0, %s37
      %s39 = sphi 0, %s37
      %s40 = sphi 0, %s39
      %s54 = sphi 0, %s40
      %s64 = sphi 0, %s66
      %s67 = sphi 0, %s64
      %s68 = sphi 0, %s67
      %s84 = sphi 0, %s68
      %s94 = sphi 0, %s96
      %s97 = sphi 0, %s94
      %s98 = sphi 0, %s97
      %s114 = sphi 0, %s98
      %s122 = sphi 0, %s124
      %s125 = sphi 0, %s122
      %s126 = sphi 0, %s125
      %s142 = sphi 0, %s126
    $region4: #{yolo_loss.1} parent=1 // loop_header_branch
      %13 = sbr.rel (%p11) target = $region8
    $region5: #{yolo_loss.1} parent=1 // loop_body
      %s15 = ssub.s32 %s10, 1
      %s16 = ssub.s32 %s10, 2
      %s26 = sadd.s32 1, %s19
      %p27 = scmp.ge.s32.totalorder %s26, 1
      %s28 = scalar_select %p27, 0, %s26
      %s29 = sadd.s32 1, %s18
      %s30 = scalar_select %p27, %s29, %s18
      %p31 = scmp.ge.s32.totalorder %s30, 3
      %s32 = scalar_select %p31, 0, %s30
      %s33 = sadd.s32 1, %s17
      %s34 = scalar_select %p31, %s33, %s17
      %p35 = scmp.ge.s32.totalorder %s34, 1
      %s36 = scalar_select %p35, 0, %s34
      %s38 = sadd.s32 %s37, 1
      %p41 = scmp.eq.s32.totalorder %s10, 2
      %p42 = scmp.ne.s32.totalorder %s37, %s39
      %p43 = scmp.eq.s32.totalorder %s10, 0
      %p44 = por %p42, %p43
      %p45 = scmp.ne.s32.totalorder %s37, %s39
      %p46 = scmp.eq.s32.totalorder %s15, 2
      %p47 = por %p45, %p46
      %p48 = scmp.ne.s32.totalorder %s39, %s40
      %p49 = scmp.eq.s32.totalorder %s15, 0
      %p50 = por %p48, %p49
      %p51 = scmp.ne.s32.totalorder %s39, %s40
      %p52 = scmp.eq.s32.totalorder %s16, 2
      %p53 = por %p51, %p52
      %p55 = scmp.ne.s32.totalorder %s40, %s54
      %p56 = scmp.eq.s32.totalorder %s16, 0
      %p57 = por %p55, %p56
      %s58 = sadd.s32 %s17, %s19
      %s59 = sadd.s32 %s36, %s28
      %s60 = ssub.s32 %s18, %s32
      %s61 = ssub.s32 %s58, %s59
      %s62 = sor.u32 %s60, %s61
      %p63 = scmp.eq.s32.totalorder %s62, 0
      %s65 = sadd.s32 %s64, 1
      %s66 = scalar_select %p63, %s64, %s65
      %p69 = pneg %p63
      %p70 = scmp.eq.s32.totalorder %s10, 2
      %p71 = por %p69, %p70
      %p72 = scmp.ne.s32.totalorder %s64, %s67
      %p73 = scmp.eq.s32.totalorder %s10, 0
      %p74 = por %p72, %p73
      %p75 = scmp.ne.s32.totalorder %s64, %s67
      %p76 = scmp.eq.s32.totalorder %s15, 2
      %p77 = por %p75, %p76
      %p78 = scmp.ne.s32.totalorder %s67, %s68
      %p79 = scmp.eq.s32.totalorder %s15, 0
      %p80 = por %p78, %p79
      %p81 = scmp.ne.s32.totalorder %s67, %s68
      %p82 = scmp.eq.s32.totalorder %s16, 2
      %p83 = por %p81, %p82
      %p85 = scmp.ne.s32.totalorder %s68, %s84
      %p86 = scmp.eq.s32.totalorder %s16, 0
      %p87 = por %p85, %p86
      %s88 = sadd.s32 %s17, %s19
      %s89 = sadd.s32 %s36, %s28
      %s90 = ssub.s32 %s18, %s32
      %s91 = ssub.s32 %s88, %s89
      %s92 = sor.u32 %s90, %s91
      %p93 = scmp.eq.s32.totalorder %s92, 0
      %s95 = sadd.s32 %s94, 1
      %s96 = scalar_select %p93, %s94, %s95
      %p99 = pneg %p93
      %p100 = scmp.eq.s32.totalorder %s10, 2
      %p101 = por %p99, %p100
      %p102 = scmp.ne.s32.totalorder %s94, %s97
      %p103 = scmp.eq.s32.totalorder %s10, 0
      %p104 = por %p102, %p103
      %p105 = scmp.ne.s32.totalorder %s94, %s97
      %p106 = scmp.eq.s32.totalorder %s15, 2
      %p107 = por %p105, %p106
      %p108 = scmp.ne.s32.totalorder %s97, %s98
      %p109 = scmp.eq.s32.totalorder %s15, 0
      %p110 = por %p108, %p109
      %p111 = scmp.ne.s32.totalorder %s97, %s98
      %p112 = scmp.eq.s32.totalorder %s16, 2
      %p113 = por %p111, %p112
      %p115 = scmp.ne.s32.totalorder %s98, %s114
      %p116 = scmp.eq.s32.totalorder %s16, 0
      %p117 = por %p115, %p116
      %s118 = ssub.s32 %s17, %s36
      %s119 = ssub.s32 %s18, %s32
      %s120 = sor.u32 %s118, %s119
      %p121 = scmp.eq.s32.totalorder %s120, 0
      %s123 = sadd.s32 %s122, 1
      %s124 = scalar_select %p121, %s122, %s123
      %p127 = pneg %p121
      %p128 = scmp.eq.s32.totalorder %s10, 2
      %p129 = por %p127, %p128
      %p130 = scmp.ne.s32.totalorder %s122, %s125
      %p131 = scmp.eq.s32.totalorder %s10, 0
      %p132 = por %p130, %p131
      %p133 = scmp.ne.s32.totalorder %s122, %s125
      %p134 = scmp.eq.s32.totalorder %s15, 2
      %p135 = por %p133, %p134
      %p136 = scmp.ne.s32.totalorder %s125, %s126
      %p137 = scmp.eq.s32.totalorder %s15, 0
      %p138 = por %p136, %p137
      %p139 = scmp.ne.s32.totalorder %s125, %s126
      %p140 = scmp.eq.s32.totalorder %s16, 2
      %p141 = por %p139, %p140
      %p143 = scmp.ne.s32.totalorder %s126, %s142
      %p144 = scmp.eq.s32.totalorder %s16, 0
      %p145 = por %p143, %p144
      %p146 = scmp.le.s32.totalorder 1, %s10
      %p147 = scmp.lt.s32.totalorder %s10, 4
      %p148 = pnand %p146, %p147
      %p149 = pneg %p148
      // Predicated region
      $region9: #{yolo_loss.1} parent=5 // pred_check
        _
      $region10: #{yolo_loss.1} parent=5 // pred_check_branch
        %151 = sbr.rel (%p148) target = $region12
      $region11: #{yolo_loss.1} parent=5 // pred_region
        %s152 = ssub.s32 %s10, 1
        // Predicated region
        $region13: #{yolo_loss.1} parent=11 // pred_check
          %p153 = pneg %p50
        $region14: #{yolo_loss.1} parent=11 // pred_check_branch
          %155 = sbr.rel (%p153) target = $region16
        $region15: #{yolo_loss.1} parent=11 // pred_region
          %s157 = ssub.s32 64, 64
          %158 = vsyncadd [#allocation3], %s157
          %s160 = sshll.u32 %s0, 4
          %s161 = int_to_ptr.vmem [resolvable:$true] %s160
          %163 = dma.vmem_to_smem %s161, 64, [#allocation2], [#allocation3]
        $region16: #{yolo_loss.1} parent=11 // pred_fallthru
          _
      $region12: #{yolo_loss.1} parent=5 // pred_fallthru
        _
      %p164 = scmp.lt.s32.totalorder %s10, 3
      // Predicated region
      $region17: #{yolo_loss.1} parent=5 // pred_check
        %p165 = pneg %p164
      $region18: #{yolo_loss.1} parent=5 // pred_check_branch
        %167 = sbr.rel (%p165) target = $region20
      $region19: #{yolo_loss.1} parent=5 // pred_region
        // Predicated region
        $region21: #{yolo_loss.1} parent=19 // pred_check
          %p168 = pneg %p74
        $region22: #{yolo_loss.1} parent=19 // pred_check_branch
          %170 = sbr.rel (%p168) target = $region24
        $region23: #{yolo_loss.1} parent=19 // pred_region
          %s171 = sadd.s32 %s17, %s19
          %p172 = scmp.lt.s32.totalorder %s18, 2
          %s173 = scalar_select %p172, %s18, 2
          %p174 = scmp.lt.s32.totalorder %s171, 0
          %s175 = scalar_select %p174, %s171, 0
          %s176 = smul.addr %s173, 2
          %s177 = sadd.s32 %s175, %s176
          %s178 = smul.addr %s177, 8
          %s179 = scalar_lea.vmem %s1, %s178
          %s180 = sadd.s32 %s17, %s19
        $region24: #{yolo_loss.1} parent=19 // pred_fallthru
          _
        // Predicated region
        $region25: #{yolo_loss.1} parent=19 // pred_check
          %p181 = pneg %p104
        $region26: #{yolo_loss.1} parent=19 // pred_check_branch
          %183 = sbr.rel (%p181) target = $region28
        $region27: #{yolo_loss.1} parent=19 // pred_region
          %s184 = sadd.s32 %s17, %s19
          %p185 = scmp.lt.s32.totalorder %s18, 2
          %s186 = scalar_select %p185, %s18, 2
          %p187 = scmp.lt.s32.totalorder %s184, 0
          %s188 = scalar_select %p187, %s184, 0
          %s189 = sadd.s32 %s188, %s186
          %s190 = smul.addr %s189, 8
          %s191 = scalar_lea.vmem %s2, %s190
          %s192 = sadd.s32 %s17, %s19
        $region28: #{yolo_loss.1} parent=19 // pred_fallthru
          _
      $region20: #{yolo_loss.1} parent=5 // pred_fallthru
        _
      %p193 = scmp.le.s32.totalorder 1, %s10
      %p194 = scmp.lt.s32.totalorder %s10, 4
      %p195 = pnand %p193, %p194
      %p196 = pneg %p195
      // Predicated region
      $region29: #{yolo_loss.1} parent=5 // pred_check
        _
      $region30: #{yolo_loss.1} parent=5 // pred_check_branch
        %198 = sbr.rel (%p195) target = $region32
      $region31: #{yolo_loss.1} parent=5 // pred_region
        %s199 = ssub.s32 %s10, 1
        // Predicated region
        $region33: #{yolo_loss.1} parent=31 // pred_check
          %p200 = pneg %p50
        $region34: #{yolo_loss.1} parent=31 // pred_check_branch
          %202 = sbr.rel (%p200) target = $region36
        $region35: #{yolo_loss.1} parent=31 // pred_region
          %203 = dma.done [#allocation3], 64
        $region36: #{yolo_loss.1} parent=31 // pred_fallthru
          _
        %204 = sfence
        %p205 = pneg %p50
        %p206 = pneg %p47
        %s207 = sadd.s32 %s20, %s22
        %p208 = scmp.lt.s32.totalorder %s21, 2
        %s209 = scalar_select %p208, %s21, 2
        %p210 = scmp.lt.s32.totalorder %s207, 0
        %s211 = scalar_select %p210, %s207, 0
        %s212 = smul.addr %s209, 2
        %s213 = sadd.s32 %s211, %s212
        %s214 = smul.addr %s213, 8
        %s215 = scalar_lea.vmem %s1, %s214
        %p216 = pneg %p80
        %p217 = pneg %p77
        %s218 = sadd.s32 %s20, %s22
        %p219 = scmp.lt.s32.totalorder %s21, 2
        %s220 = scalar_select %p219, %s21, 2
        %p221 = scmp.lt.s32.totalorder %s218, 0
        %s222 = scalar_select %p221, %s218, 0
        %s223 = sadd.s32 %s222, %s220
        %s224 = smul.addr %s223, 8
        %s225 = scalar_lea.vmem %s2, %s224
        %p226 = pneg %p110
        %p227 = pneg %p107
        %p228 = pneg %p138
        %p229 = pneg %p135
        %p230 = scmp.lt.s32.totalorder %s20, 0
        %s231 = scalar_select %p230, %s20, 0
        %p232 = scmp.lt.s32.totalorder %s21, 2
        %s233 = scalar_select %p232, %s21, 2
        %s234 = smul.addr %s231, 3
        %s235 = sadd.s32 %s233, %s234
        %s236 = smul.addr %s235, 8
        %s237 = scalar_lea.vmem %s3, %s236
        %s238 = sadd.s32 %s20, %s22
        %p239 = scmp.lt.s32.totalorder %s21, 2
        %s240 = scalar_select %p239, %s21, 2
        %p241 = scmp.lt.s32.totalorder %s238, 0
        %s242 = scalar_select %p241, %s238, 0
        %s243 = smul.addr %s240, 2
        %s244 = sadd.s32 %s242, %s243
        %s245 = smul.addr %s244, 8
        %s246 = scalar_lea.vmem %s1, %s245
        %s247 = sadd.s32 %s20, %s22
        %s248 = sadd.s32 %s20, %s22
        %p249 = scmp.lt.s32.totalorder %s21, 2
        %s250 = scalar_select %p249, %s21, 2
        %p251 = scmp.lt.s32.totalorder %s248, 0
        %s252 = scalar_select %p251, %s248, 0
        %s253 = sadd.s32 %s252, %s250
        %s254 = smul.addr %s253, 8
        %s255 = scalar_lea.vmem %s2, %s254
        %s256 = sadd.s32 %s20, %s22
        %p257 = scmp.lt.s32.totalorder %s20, 0
        %s258 = scalar_select %p257, %s20, 0
        %p259 = scmp.lt.s32.totalorder %s21, 2
        %s260 = scalar_select %p259, %s21, 2
        %s261 = smul.addr %s258, 3
        %s262 = sadd.s32 %s260, %s261
        %s263 = smul.addr %s262, 8
        %s264 = scalar_lea.vmem %s3, %s263
        %s265 = smul.u32 %s21, 128
        %s266 = sld [smem:[#allocation2 + %s265]]
        %s267 = sadd.s32 %s265, 1
        %s268 = sld [smem:[#allocation2 + %s267]]
        %v269 = vstv %s266
        %v270 = vrcp.pop %v269
        %s271 = vtos %v270
        %v272 = vstv %s268
        %v273 = vrcp.pop %v272
        %s274 = vtos %v273
        %v275 = vld [vmem:[%s246] sm:$0xff]
        %v276 = vld [vmem:[%s246 + $0x8] sm:$0x1]
        %v277 = vld [vmem:[%s255] sm:$0x3f]
        %vm278 = vcmp.eq.f32.partialorder %v277, 1.0
        %v279 = vsel %vm278, 1, 0
        %v280 = vcvt.s32.f32 %v279
        %vm281 = vcmp.eq.f32.partialorder %v277, 0.0
        %v282 = vsel %vm281, 1, 0
        %v283 = vcvt.s32.f32 %v282
        %v284 = vand.u32 2147483647, %v275
        %v285 = vsub.f32 0.0, %v284
        %v286 = vmul.f32 %v285, 1.442695
        %v287 = vpow.pop %v286
        %v288 = vmax.f32 %v275, 0.0
        %v289 = vmul.f32 %v275, %v277
        %v290 = vsub.f32 %v288, %v289
        %v291 = vadd.f32 %v287, 1.0
        %v292 = vlog2.pop %v291
        %v293 = vmul.f32 %v292, 0.6931472
        %v294 = vmul.f32 -0.5, %v287
        %v295 = vadd.f32 %v294, 1.0
        %v296 = vmul.f32 %v295, %v287
        %v297 = vand.u32 2147483647, %v287
        %vm298 = vcmp.lt.f32.partialorder %v297, 0.0004427343
        %v299 = vsel %vm298, %v296, %v293
        %v300 = vadd.f32 %v290, %v299
        %vm301 = vcmp.ge.f32.partialorder %v275, 0.0
        %v302 = vsel %vm301, 1.0, %v287
        %v303 = vadd.f32 %v287, 1.0
        %v304 = vrcp.pop %v303
        %v305 = vmul.f32 %v302, %v304
        %v306 = vxor.u32 %v275, 2147483648
        %v307 = vmul.f32 %v306, 1.442695
        %v308 = vpow.pop %v307
        %v309 = vadd.f32 %v308, 1.0
        %v310 = vrcp.pop %v309
        %v311 = vmul.f32 1.0, %v310
        %v312 = vmul.f32 %v275, 1.442695
        %v313 = vpow.pop %v312
        %v314 = vstv %s266
        %v315 = vmul.f32 %v313, %v314
        %v316 = vstv %s268
        %v317 = vmul.f32 %v313, %v316
        %v318 = vmul.f32 %v315, 0.5
        %v320 = vrot.slane %v318, 2
        %v322 = vsub.f32 %v311, %v320
        %v323 = vmul.f32 %v317, 0.5
        %v325 = vrot.slane %v323, 2
        %v327 = vsub.f32 %v311, %v325
        %v328 = vadd.f32 %v311, %v320
        %v329 = vadd.f32 %v311, %v325
        %v330 = vmul.f32 %v277, 0.5
        %v332 = vrot.slane %v330, 2
        %v334 = vsub.f32 %v277, %v332
        %v335 = vadd.f32 %v277, %v332
        %v336 = vmin.f32 %v328, %v335
        %v337 = vmax.f32 %v322, %v334
        %v338 = vsub.f32 %v336, %v337
        %v339 = vmax.f32 %v338, 0.0
        %v340 = vmin.f32 %v329, %v335
        %v341 = vmax.f32 %v327, %v334
        %v342 = vsub.f32 %v340, %v341
        %v343 = vmax.f32 %v342, 0.0
        %v345 = vrot.slane %v343, 1
        %v347 = vmul.f32 %v339, %v345
        %v349 = vrot.slane %v317, 1
        %v351 = vmul.f32 %v315, %v349
        %v353 = vrot.slane %v277, 1
        %v355 = vmul.f32 %v277, %v353
        %v356 = vadd.f32 %v351, %v355
        %v358 = vrot.slane %v347, 6
        %v360 = vsub.f32 %v356, %v358
        %v361 = vadd.f32 %v360, 1e-06
        %v362 = vrcp.pop %v361
        %v364 = vrot.slane %v362, 2
        %v366 = vmul.f32 %v347, %v364
        %v367 = vrot.slane %v277, 7
        %v369 = vmul.f32 %v366, %v367
        %v371 = vrot.slane %v369, 1
        %v373 = vsub.f32 %v305, %v371
        %v374 = vmul.f32 %v373, %v373
        %v375 = vstv %s271
        %v376 = vmul.f32 %v277, %v375
        %v377 = vadd.f32 %v376, 1e-16
        %v378 = vlog2.pop %v377
        %v379 = vmul.f32 %v378, 0.6931472
        %v380 = vstv %s274
        %v381 = vmul.f32 %v277, %v380
        %v382 = vadd.f32 %v381, 1e-16
        %v383 = vlog2.pop %v382
        %v384 = vmul.f32 %v383, 0.6931472
        %v385 = vsub.f32 %v311, %v277
        %v386 = vmul.f32 %v385, %v385
        %v388 = vrot.slane %v386, 1
        %v390 = vadd.f32 %v386, %v388
        %v391 = vsub.f32 %v275, %v379
        %v392 = vmul.f32 %v391, %v391
        %v394 = vrot.slane %v392, 2
        %v396 = vadd.f32 %v390, %v394
        %v397 = vsub.f32 %v275, %v384
        %v398 = vmul.f32 %v397, %v397
        %v400 = vrot.slane %v398, 3
        %v402 = vadd.f32 %v396, %v400
        %vm403 = vcmask 1047557
        %v404 = vsel %vm403, %v275, -inf
        %vm405 = vcmask 1040384
        %v406 = vsel %vm405, %v276, -inf
        %v407 = vmax.f32 %v404, %v406
        %v408 = vrot.slane %v407, 4
        %v409 = vmax.f32 %v407, %v408
        %v410 = vrot.slane %v409, 2
        %v411 = vmax.f32 %v409, %v410
        %v412 = vrot.slane %v411, 1
        %v413 = vmax.f32 %v411, %v412
        %v414 = vsub.f32 %v275, %v413
        %v415 = vsub.f32 %v276, %v413
        %v416 = vmul.f32 %v414, 1.442695
        %v417 = vpow.pop %v416
        %v418 = vmul.f32 %v415, 1.442695
        %v419 = vpow.pop %v418
        %vm422 = vcmask 1042432
        %v423 = vrot.slane %v417, 5
        %v424 = vrot.slane %v419, 5
        %v425 = vsel %vm422, %v423, %v424
        %vm427 = vcmask 1043456
        %v428 = vsel %vm427, %v425, 0.0
        %v429 = vrot.slane %v428, 4
        %v430 = vadd.f32 %v428, %v429
        %v431 = vrot.slane %v430, 2
        %v432 = vadd.f32 %v430, %v431
        %v433 = vrot.slane %v432, 1
        %v434 = vadd.f32 %v432, %v433
        %v435 = vlog2.pop %v434
        %v436 = vmul.f32 %v435, 0.6931472
        %v437 = vadd.f32 %v413, %v436
        %v438 = vcvt.f32.s32.to.zero.pseudo %v277
        %v439 = vlaneseq
        %v440 = vshrl.u32 %v439, 7
        %v441 = vlaneseq
        %v442 = vshrl.u32 %v441, 7
        %v443 = vsub.s32 5, %v442
        %v444 = vrot.slane %v438, %v443
        %vm445 = vcmp.eq.s32.totalorder %v440, %v444
        %v448 = vrot.slane %v275, 5
        %v449 = vrot.slane %v276, 5
        %v450 = vsel %vm422, %v448, %v449
        %v452 = vsel %vm445, %v450, 0.0
        %v453 = vsel %vm427, %v452, 0.0
        %v454 = vrot.slane %v453, 4
        %v455 = vadd.f32 %v453, %v454
        %v456 = vrot.slane %v455, 2
        %v457 = vadd.f32 %v455, %v456
        %v458 = vrot.slane %v457, 1
        %v459 = vadd.f32 %v457, %v458
        %v460 = vsub.f32 %v437, %v459
        %v461 = vmul.f32 %v300, %v283
        %v462 = vmul.f32 %v374, %v280
        %v464 = vrot.slane %v280, 7
        %v466 = vmul.f32 %v402, %v464
        %v467 = vmul.f32 %v460, %v280
        %v469 = vrot.slane %v283, 7
        %v472 = vrot.slane %v462, 6
        %v474 = vrot.slane %v280, 5
        %v477 = vrot.slane %v466, 5
        %v480 = vrot.slane %v467, 3
        %v482 = vsel %vm405, %v461, %v469
        %vm483 = vcmask 1041408
        %v484 = vsel %vm483, %v482, %v472
        %v485 = vsel %vm422, %v484, %v474
        %v486 = vsel %vm427, %v485, %v477
        %vm487 = vcmask 1044480
        %v488 = vsel %vm487, %v486, %v480
        %vm489 = vcmask 1045504
        %v490 = vsel %vm489, %v488, 0.0
        %p491 = scmp.eq.s32.totalorder %s22, 0
        // Predicated region
        $region37: #{yolo_loss.1} parent=31 // pred_check
          %p492 = pneg %p491
        $region38: #{yolo_loss.1} parent=31 // pred_check_branch
          %494 = sbr.rel (%p492) target = $region40
        $region39: #{yolo_loss.1} parent=31 // pred_region
          %495 = vst [vmem:[%s264] sm:$0xff] %v490
        $region40: #{yolo_loss.1} parent=31 // pred_fallthru
          _
        %p496 = scmp.ne.s32.totalorder %s22, 0
        // Predicated region
        $region41: #{yolo_loss.1} parent=31 // pred_check
          %p497 = pneg %p496
        $region42: #{yolo_loss.1} parent=31 // pred_check_branch
          %499 = sbr.rel (%p497) target = $region44
        $region43: #{yolo_loss.1} parent=31 // pred_region
          %v500 = vld [vmem:[%s264] sm:$0xff]
          %v501 = vadd.f32 %v500, %v490
          %502 = vst [vmem:[%s264] sm:$0xff] %v501
        $region44: #{yolo_loss.1} parent=31 // pred_fallthru
          _
        %p503 = scmp.lt.s32.totalorder %s20, 0
        %s504 = scalar_select %p503, %s20, 0
        %p505 = scmp.lt.s32.totalorder %s21, 2
        %s506 = scalar_select %p505, %s21, 2
        %s507 = smul.addr %s504, 3
        %s508 = sadd.s32 %s506, %s507
        %s509 = smul.addr %s508, 8
        %s510 = scalar_lea.vmem %s3, %s509
        // Predicated region
        $region45: #{yolo_loss.1} parent=31 // pred_check
          %p511 = pneg %p135
        $region46: #{yolo_loss.1} parent=31 // pred_check_branch
          %513 = sbr.rel (%p511) target = $region48
        $region47: #{yolo_loss.1} parent=31 // pred_region
          _
        $region48: #{yolo_loss.1} parent=31 // pred_fallthru
          _
      $region32: #{yolo_loss.1} parent=5 // pred_fallthru
        _
      %p514 = scmp.le.s32.totalorder 2, %s10
      // Predicated region
      $region49: #{yolo_loss.1} parent=5 // pred_check
        %p515 = pneg %p514
      $region50: #{yolo_loss.1} parent=5 // pred_check_branch
        %517 = sbr.rel (%p515) target = $region52
      $region51: #{yolo_loss.1} parent=5 // pred_region
        %s518 = ssub.s32 %s10, 2
        // Predicated region
        $region53: #{yolo_loss.1} parent=51 // pred_check
          %p519 = pneg %p141
        $region54: #{yolo_loss.1} parent=51 // pred_check_branch
          %521 = sbr.rel (%p519) target = $region56
        $region55: #{yolo_loss.1} parent=51 // pred_region
          %p522 = scmp.lt.s32.totalorder %s23, 0
          %s523 = scalar_select %p522, %s23, 0
          %p524 = scmp.lt.s32.totalorder %s24, 2
          %s525 = scalar_select %p524, %s24, 2
          %s526 = smul.addr %s523, 3
          %s527 = sadd.s32 %s525, %s526
          %s528 = smul.addr %s527, 8
          %s529 = scalar_lea.vmem %s3, %s528
        $region56: #{yolo_loss.1} parent=51 // pred_fallthru
          _
      $region52: #{yolo_loss.1} parent=5 // pred_fallthru
        _
    $region6: #{yolo_loss.1} parent=1 // loop_footer
      %s14 = sadd.s32 1, %s10
    $region7: #{yolo_loss.1} parent=1 // loop_footer_branch
      %9 = sbr.rel target = $region3
    $region8: #{yolo_loss.1} parent=1 // loop_exit
      _
    %530 = vsyncpa [#allocation3], 1
    %s531 = scalar_lea.sflag [#allocation3], 1
    %532 = vsyncpa %s531, 1

</llo_original>
